<compile_context>
chip_gen: v6e
topology: v6e:2x2x1
jax: 0.10.0
libtpu: 0.0.40
codegen_flags: <defaults>
</compile_context>

<pallas_src>
import jax
import jax.numpy as jnp
from jax.experimental import pallas as pl
from jax.experimental.pallas import tpu as pltpu

_LANE = 128
_SUBLANE = 8


def _round_up(n, m):
    return ((n + m - 1) // m) * m


# ----------------------------------------------------------------------------
# Kernel: one batch tile per grid step, weights resident in VMEM.
# ----------------------------------------------------------------------------
def simple_nn_kernel(x_ref, w1_ref, b1_ref, w2_ref, b2_ref, o_ref):
    # bf16 operands -> native MXU rate; f32 accumulation via preferred_element_type.
    x = x_ref[...].astype(w1_ref.dtype)
    h = jnp.dot(x, w1_ref[...], preferred_element_type=jnp.float32)
    h = jnp.maximum(h + b1_ref[...], 0.0)          # f32 epilogue (v5e: no bf16 VPU)
    y = jnp.dot(h.astype(w2_ref.dtype), w2_ref[...],
                preferred_element_type=jnp.float32)
    o_ref[...] = (y + b2_ref[...]).astype(o_ref.dtype)


# ----------------------------------------------------------------------------
# One-time parameter preparation (hoisted out of the per-call forward).
# ----------------------------------------------------------------------------
def prepare_params(w1, b1, w2, b2, *, compute_dtype=jnp.bfloat16):
    """w1: (in, hidden)  b1: (hidden,)|(1,hidden)  w2: (hidden, out)  b2: (out,)|(1,out).
    Pads only the hidden dim to a 128 multiple; casts weights to compute_dtype."""
    in_size, hidden = w1.shape
    out_size = w2.shape[1]
    hid_p = _round_up(hidden, _LANE)

    b1 = jnp.reshape(b1, (1, hidden)).astype(jnp.float32)
    b2 = jnp.reshape(b2, (1, out_size)).astype(jnp.float32)

    w1p = jnp.zeros((in_size, hid_p), compute_dtype).at[:, :hidden].set(
        w1.astype(compute_dtype))
    b1p = jnp.zeros((1, hid_p), jnp.float32).at[:, :hidden].set(b1)
    # Padded W2 rows are zero, so the (ReLU'd, zero) padded hidden lanes add 0.
    w2p = jnp.zeros((hid_p, out_size), compute_dtype).at[:hidden, :].set(
        w2.astype(compute_dtype))

    return dict(w1=w1p, b1=b1p, w2=w2p, b2=b2,
                in_size=in_size, hidden=hidden, out_size=out_size, hid_p=hid_p)


# ----------------------------------------------------------------------------
# Per-generation budgets & batch-tile choice.
# ----------------------------------------------------------------------------
def _tpu_budget():
    vmem = 64 << 20                     # conservative default (v7x: 64 MiB / TC)
    try:
        vmem = int(pltpu.get_tpu_info().vmem_capacity_bytes)
    except Exception:
        pass
    if vmem >= (100 << 20):             # v5e / v6e: 128 MiB physical VMEM
        return min(112 << 20, vmem - (16 << 20)), 1024
    return 48 << 20, 512                # v7x


def _choose_tb(batch, tb_max):
    """Batch tile: multiple of 8, minimal overshoot, >=2 grid steps when possible
    (so the parallel batch axis engages both TensorCores on v7x)."""
    b8 = _round_up(max(batch, 1), _SUBLANE)
    if b8 <= _SUBLANE:
        return b8
    if b8 <= 2 * tb_max:
        return _round_up((b8 + 1) // 2, _SUBLANE)     # exactly 2 tiles
    n_tiles = -(-b8 // tb_max)
    return _round_up(-(-b8 // n_tiles), _SUBLANE)     # overshoot < n_tiles * 8


def _build_pallas_call(grid, tb, in_size, hid_p, out_size, out_dtype,
                       vmem_limit, single_buffer_weights):
    def wspec(shape):
        if single_buffer_weights:
            # Constant index_map => the tile never changes; one buffer is enough.
            return pl.BlockSpec(shape, lambda i: (0, 0),
                                pipeline_mode=pl.Buffered(1))
        return pl.BlockSpec(shape, lambda i: (0, 0))

    return pl.pallas_call(
        simple_nn_kernel,
        out_shape=jax.ShapeDtypeStruct((grid * tb, out_size), out_dtype),
        grid_spec=pl.GridSpec(
            grid=(grid,),
            in_specs=[
                pl.BlockSpec((tb, in_size), lambda i: (i, 0)),   # x: batch-tiled
                wspec((in_size, hid_p)),                         # W1: resident
                wspec((1, hid_p)),                               # b1: resident
                wspec((hid_p, out_size)),                        # W2: resident
                wspec((1, out_size)),                            # b2: resident
            ],
            out_specs=pl.BlockSpec((tb, out_size), lambda i: (i, 0)),
        ),
        compiler_params=pltpu.CompilerParams(
            dimension_semantics=("parallel",),        # shard batch across TCs (v7x)
            vmem_limit_bytes=vmem_limit,
        ),
    )


# ----------------------------------------------------------------------------
# Forward pass (no per-call weight copies; x copy only when batch must be padded).
# ----------------------------------------------------------------------------
def simple_nn_forward(x, params):
    B, in_size = x.shape
    assert in_size == params["in_size"], "input feature dim mismatch"
    hid_p, out_size = params["hid_p"], params["out_size"]

    vmem_limit, tb_max = _tpu_budget()
    tb = _choose_tb(B, tb_max)

    # Crude VMEM guard: shrink the batch tile if tiles + resident weights
    # approach the scoped limit (accounts for double-buffered x/out and h).
    w_bytes = (params["w1"].size * params["w1"].dtype.itemsize
               + params["w2"].size * params["w2"].dtype.itemsize)

    def footprint(t):
        return (2 * t * in_size * x.dtype.itemsize      # x (double-buffered)
                + 2 * t * out_size * 4                  # out (double-buffered)
                + t * hid_p * 4                         # fc1 activation
                + w_bytes)                              # resident weights

    while tb > _SUBLANE and footprint(tb) > (vmem_limit * 3) // 4:
        tb = _round_up(tb // 2, _SUBLANE)

    b8 = _round_up(B, _SUBLANE)
    grid = -(-b8 // tb)
    bp = grid * tb

    # Fast path: no activation copy when the batch already tiles evenly.
    xp = x if bp == B else jnp.zeros((bp, in_size), x.dtype).at[:B].set(x)

    def run(single_buffer):
        call = _build_pallas_call(grid, tb, in_size, hid_p, out_size, x.dtype,
                                  vmem_limit, single_buffer)
        return call(xp, params["w1"], params["b1"], params["w2"], params["b2"])

    want_single = hasattr(pl, "Buffered")
    try:
        out = run(want_single)
    except Exception:
        if not want_single:
            raise
        out = run(False)     # fallback: default double-buffered resident weights

    return out if bp == B else out[:B]


# ----------------------------------------------------------------------------
# Deterministic init mimicking nn.Linear's uniform(-1/sqrt(fan_in), +).
# ----------------------------------------------------------------------------
def init_params(key, input_size, hidden_size, output_size):
    k1, k2, k3, k4 = jax.random.split(key, 4)
    bound1 = 1.0 / (input_size ** 0.5)
    bound2 = 1.0 / (hidden_size ** 0.5)
    # Stored as (in, out) = transpose of PyTorch's (out, in) layout.
    w1 = jax.random.uniform(k1, (input_size, hidden_size),
                            minval=-bound1, maxval=bound1, dtype=jnp.float32)
    b1 = jax.random.uniform(k2, (1, hidden_size),
                            minval=-bound1, maxval=bound1, dtype=jnp.float32)
    w2 = jax.random.uniform(k3, (hidden_size, output_size),
                            minval=-bound2, maxval=bound2, dtype=jnp.float32)
    b2 = jax.random.uniform(k4, (1, output_size),
                            minval=-bound2, maxval=bound2, dtype=jnp.float32)
    return w1, b1, w2, b2


if __name__ == "__main__":
    batch = 8
    input_size = 64
    hidden_size = 32
    output_size = 16

    key = jax.random.PRNGKey(0)
    kx, kp = jax.random.split(key)
    x = jax.random.normal(kx, (batch, input_size), dtype=jnp.float32)
    w1, b1, w2, b2 = init_params(kp, input_size, hidden_size, output_size)

    ref = jnp.maximum(x @ w1 + b1, 0.0) @ w2 + b2   # pure-JAX f32 reference

    # Default path: bf16 operands, f32 accumulation (fast path, loose tolerance).
    params_bf16 = prepare_params(w1, b1, w2, b2)            # one-time prep
    out = jax.block_until_ready(simple_nn_forward(x, params_bf16))
    assert out.shape == (batch, output_size)
    assert jnp.allclose(out, ref, atol=2e-2, rtol=2e-2)

    # f32-operand path: bit-accurate check of the same kernel structure,
    # also exercises the padded-batch path (B=5 -> tb=8).
    params_f32 = prepare_params(w1, b1, w2, b2, compute_dtype=jnp.float32)
    out_f32 = jax.block_until_ready(simple_nn_forward(x[:5], params_f32))
    assert out_f32.shape == (5, output_size)
    assert jnp.allclose(out_f32, ref[:5], atol=1e-5, rtol=1e-5)

    print("KERNEL_OK")
</pallas_src>

<mosaic_0001>
module attributes {stable_mosaic.version = 11 : i64} {
  func.func @simple_nn_kernel(%arg0: i32, %arg1: memref<8x64xf32, #tpu.memory_space<vmem>>, %arg2: memref<64x128xbf16, #tpu.memory_space<vmem>>, %arg3: memref<1x128xf32, #tpu.memory_space<vmem>>, %arg4: memref<128x16xbf16, #tpu.memory_space<vmem>>, %arg5: memref<1x16xf32, #tpu.memory_space<vmem>>, %arg6: memref<8x16xf32, #tpu.memory_space<vmem>>) attributes {dimension_semantics = [#tpu.dimension_semantics<parallel>], iteration_bounds = array<i64: 1>, scalar_prefetch = 0 : i64, scratch_operands = 0 : i64, tpu.core_type = #tpu.core_type<tc>, window_params = [{transform_indices = @transform_0, window_bounds = array<i64: 8, 64>}, {pipeline_mode = #tpu.pipeline_mode<synchronous>, transform_indices = @transform_1, window_bounds = array<i64: 64, 128>}, {pipeline_mode = #tpu.pipeline_mode<synchronous>, transform_indices = @transform_2, window_bounds = array<i64: 1, 128>}, {pipeline_mode = #tpu.pipeline_mode<synchronous>, transform_indices = @transform_3, window_bounds = array<i64: 128, 16>}, {pipeline_mode = #tpu.pipeline_mode<synchronous>, transform_indices = @transform_4, window_bounds = array<i64: 1, 16>}, {transform_indices = @transform_5, window_bounds = array<i64: 8, 16>}]} {
    %c0 = arith.constant 0 : index
    %c0_0 = arith.constant 0 : index
    %0 = vector.load %arg1[%c0, %c0_0] : memref<8x64xf32, #tpu.memory_space<vmem>>, vector<8x64xf32>
    %1 = arith.truncf %0 : vector<8x64xf32> to vector<8x64xbf16>
    %c0_1 = arith.constant 0 : index
    %c0_2 = arith.constant 0 : index
    %2 = vector.load %arg2[%c0_1, %c0_2] : memref<64x128xbf16, #tpu.memory_space<vmem>>, vector<64x128xbf16>
    %cst = arith.constant dense<0.000000e+00> : vector<8x128xf32>
    %3 = tpu.matmul %1, %2, %cst {dimension_numbers = #tpu.dot_dimension_numbers<[1], [0], [0], [1], [0, 0, 1, 1], [], []>} : vector<8x64xbf16>, vector<64x128xbf16>, vector<8x128xf32> -> vector<8x128xf32>
    %c0_3 = arith.constant 0 : index
    %c0_4 = arith.constant 0 : index
    %4 = vector.load %arg3[%c0_3, %c0_4] : memref<1x128xf32, #tpu.memory_space<vmem>>, vector<1x128xf32>
    %5 = vector.broadcast %4 : vector<1x128xf32> to vector<8x128xf32>
    %6 = arith.addf %3, %5 : vector<8x128xf32>
    %cst_5 = arith.constant 0.000000e+00 : f32
    %7 = vector.broadcast %cst_5 : f32 to vector<8x128xf32>
    %8 = arith.maximumf %6, %7 : vector<8x128xf32>
    %9 = arith.truncf %8 : vector<8x128xf32> to vector<8x128xbf16>
    %c0_6 = arith.constant 0 : index
    %c0_7 = arith.constant 0 : index
    %10 = vector.load %arg4[%c0_6, %c0_7] : memref<128x16xbf16, #tpu.memory_space<vmem>>, vector<128x16xbf16>
    %cst_8 = arith.constant dense<0.000000e+00> : vector<8x16xf32>
    %11 = tpu.matmul %9, %10, %cst_8 {dimension_numbers = #tpu.dot_dimension_numbers<[1], [0], [0], [1], [0, 0, 1, 1], [], []>} : vector<8x128xbf16>, vector<128x16xbf16>, vector<8x16xf32> -> vector<8x16xf32>
    %c0_9 = arith.constant 0 : index
    %c0_10 = arith.constant 0 : index
    %12 = vector.load %arg5[%c0_9, %c0_10] : memref<1x16xf32, #tpu.memory_space<vmem>>, vector<1x16xf32>
    %13 = vector.broadcast %12 : vector<1x16xf32> to vector<8x16xf32>
    %14 = arith.addf %11, %13 : vector<8x16xf32>
    %c0_11 = arith.constant 0 : index
    %c0_12 = arith.constant 0 : index
    %15 = vector.load %arg6[%c0_11, %c0_12] : memref<8x16xf32, #tpu.memory_space<vmem>>, vector<8x16xf32>
    tpu.vector_store %arg6[%c0_11, %c0_12], %14 {strides = array<i32>} : memref<8x16xf32, #tpu.memory_space<vmem>>, vector<8x16xf32>,
    return
  }
  func.func @transform_0(%arg0: i32) -> (i32, i32) {
    %c0_i32 = arith.constant 0 : i32
    %c0_i32_0 = arith.constant 0 : i32
    return %arg0, %c0_i32 : i32, i32
  }
  func.func @transform_1(%arg0: i32) -> (i32, i32) {
    %c0_i32 = arith.constant 0 : i32
    %c0_i32_0 = arith.constant 0 : i32
    %c0_i32_1 = arith.constant 0 : i32
    return %c0_i32, %c0_i32_0 : i32, i32
  }
  func.func @transform_2(%arg0: i32) -> (i32, i32) {
    %c0_i32 = arith.constant 0 : i32
    %c0_i32_0 = arith.constant 0 : i32
    %c0_i32_1 = arith.constant 0 : i32
    return %c0_i32, %c0_i32_0 : i32, i32
  }
  func.func @transform_3(%arg0: i32) -> (i32, i32) {
    %c0_i32 = arith.constant 0 : i32
    %c0_i32_0 = arith.constant 0 : i32
    %c0_i32_1 = arith.constant 0 : i32
    return %c0_i32, %c0_i32_0 : i32, i32
  }
  func.func @transform_4(%arg0: i32) -> (i32, i32) {
    %c0_i32 = arith.constant 0 : i32
    %c0_i32_0 = arith.constant 0 : i32
    %c0_i32_1 = arith.constant 0 : i32
    return %c0_i32, %c0_i32_0 : i32, i32
  }
  func.func @transform_5(%arg0: i32) -> (i32, i32) {
    %c0_i32 = arith.constant 0 : i32
    %c0_i32_0 = arith.constant 0 : i32
    return %arg0, %c0_i32 : i32, i32
  }
}

module attributes {stable_mosaic.version = 11 : i64} {
  func.func @simple_nn_kernel(%arg0: i32, %arg1: memref<8x64xf32, #tpu.memory_space<vmem>>, %arg2: memref<64x128xbf16, #tpu.memory_space<vmem>>, %arg3: memref<1x128xf32, #tpu.memory_space<vmem>>, %arg4: memref<128x16xbf16, #tpu.memory_space<vmem>>, %arg5: memref<1x16xf32, #tpu.memory_space<vmem>>, %arg6: memref<8x16xf32, #tpu.memory_space<vmem>>) attributes {dimension_semantics = [#tpu.dimension_semantics<parallel>], iteration_bounds = array<i64: 1>, scalar_prefetch = 0 : i64, scratch_operands = 0 : i64, tpu.core_type = #tpu.core_type<tc>, window_params = [{transform_indices = @transform_0, window_bounds = array<i64: 8, 64>}, {pipeline_mode = #tpu.pipeline_mode<synchronous>, transform_indices = @transform_1, window_bounds = array<i64: 64, 128>}, {pipeline_mode = #tpu.pipeline_mode<synchronous>, transform_indices = @transform_2, window_bounds = array<i64: 1, 128>}, {pipeline_mode = #tpu.pipeline_mode<synchronous>, transform_indices = @transform_3, window_bounds = array<i64: 128, 16>}, {pipeline_mode = #tpu.pipeline_mode<synchronous>, transform_indices = @transform_4, window_bounds = array<i64: 1, 16>}, {transform_indices = @transform_5, window_bounds = array<i64: 8, 16>}]} {
    %c0 = arith.constant 0 : index
    %c0_0 = arith.constant 0 : index
    %0 = vector.load %arg1[%c0, %c0_0] : memref<8x64xf32, #tpu.memory_space<vmem>>, vector<8x64xf32>
    %1 = arith.truncf %0 : vector<8x64xf32> to vector<8x64xbf16>
    %c0_1 = arith.constant 0 : index
    %c0_2 = arith.constant 0 : index
    %2 = vector.load %arg2[%c0_1, %c0_2] : memref<64x128xbf16, #tpu.memory_space<vmem>>, vector<64x128xbf16>
    %cst = arith.constant dense<0.000000e+00> : vector<8x128xf32>
    %3 = tpu.matmul %1, %2, %cst {dimension_numbers = #tpu.dot_dimension_numbers<[1], [0], [0], [1], [0, 0, 1, 1], [], []>} : vector<8x64xbf16>, vector<64x128xbf16>, vector<8x128xf32> -> vector<8x128xf32>
    %c0_3 = arith.constant 0 : index
    %c0_4 = arith.constant 0 : index
    %4 = vector.load %arg3[%c0_3, %c0_4] : memref<1x128xf32, #tpu.memory_space<vmem>>, vector<1x128xf32>
    %5 = vector.broadcast %4 : vector<1x128xf32> to vector<8x128xf32>
    %6 = arith.addf %3, %5 : vector<8x128xf32>
    %cst_5 = arith.constant 0.000000e+00 : f32
    %7 = vector.broadcast %cst_5 : f32 to vector<8x128xf32>
    %8 = arith.maximumf %6, %7 : vector<8x128xf32>
    %9 = arith.truncf %8 : vector<8x128xf32> to vector<8x128xbf16>
    %c0_6 = arith.constant 0 : index
    %c0_7 = arith.constant 0 : index
    %10 = vector.load %arg4[%c0_6, %c0_7] : memref<128x16xbf16, #tpu.memory_space<vmem>>, vector<128x16xbf16>
    %cst_8 = arith.constant dense<0.000000e+00> : vector<8x16xf32>
    %11 = tpu.matmul %9, %10, %cst_8 {dimension_numbers = #tpu.dot_dimension_numbers<[1], [0], [0], [1], [0, 0, 1, 1], [], []>} : vector<8x128xbf16>, vector<128x16xbf16>, vector<8x16xf32> -> vector<8x16xf32>
    %c0_9 = arith.constant 0 : index
    %c0_10 = arith.constant 0 : index
    %12 = vector.load %arg5[%c0_9, %c0_10] : memref<1x16xf32, #tpu.memory_space<vmem>>, vector<1x16xf32>
    %13 = vector.broadcast %12 : vector<1x16xf32> to vector<8x16xf32>
    %14 = arith.addf %11, %13 : vector<8x16xf32>
    %c0_11 = arith.constant 0 : index
    %c0_12 = arith.constant 0 : index
    %15 = vector.load %arg6[%c0_11, %c0_12] : memref<8x16xf32, #tpu.memory_space<vmem>>, vector<8x16xf32>
    tpu.vector_store %arg6[%c0_11, %c0_12], %14 {strides = array<i32>} : memref<8x16xf32, #tpu.memory_space<vmem>>, vector<8x16xf32>,
    return
  }
  func.func @transform_0(%arg0: i32) -> (i32, i32) {
    %c0_i32 = arith.constant 0 : i32
    %c0_i32_0 = arith.constant 0 : i32
    return %arg0, %c0_i32 : i32, i32
  }
  func.func @transform_1(%arg0: i32) -> (i32, i32) {
    %c0_i32 = arith.constant 0 : i32
    %c0_i32_0 = arith.constant 0 : i32
    %c0_i32_1 = arith.constant 0 : i32
    return %c0_i32, %c0_i32_0 : i32, i32
  }
  func.func @transform_2(%arg0: i32) -> (i32, i32) {
    %c0_i32 = arith.constant 0 : i32
    %c0_i32_0 = arith.constant 0 : i32
    %c0_i32_1 = arith.constant 0 : i32
    return %c0_i32, %c0_i32_0 : i32, i32
  }
  func.func @transform_3(%arg0: i32) -> (i32, i32) {
    %c0_i32 = arith.constant 0 : i32
    %c0_i32_0 = arith.constant 0 : i32
    %c0_i32_1 = arith.constant 0 : i32
    return %c0_i32, %c0_i32_0 : i32, i32
  }
  func.func @transform_4(%arg0: i32) -> (i32, i32) {
    %c0_i32 = arith.constant 0 : i32
    %c0_i32_0 = arith.constant 0 : i32
    %c0_i32_1 = arith.constant 0 : i32
    return %c0_i32, %c0_i32_0 : i32, i32
  }
  func.func @transform_5(%arg0: i32) -> (i32, i32) {
    %c0_i32 = arith.constant 0 : i32
    %c0_i32_0 = arith.constant 0 : i32
    return %arg0, %c0_i32 : i32, i32
  }
}

</mosaic_0001>

<llo_original>
// kernel: tpu_custom_call.1
$region0: #{tpu_custom_call.1}
  #allocation0 [shape = 'u32[]', space=smem, size = 0x4, offset = 0x4, fixed_abs, tag = 'smem constant byte address 0x4 - core index']
  #allocation1 [shape = 'u32[144,128]{1,0:T(1,128)}', space=vmem, size = 0x12000, scoped, tag = 'internal scratch']
  %s0 = inlined_call_operand.vmem [shape: f32[8,64], index: 0, kind: input, shape index: {}]
  %s1 = inlined_call_operand.vmem [shape: bf16[64,128], index: 1, kind: input, shape index: {}]
  %s2 = inlined_call_operand.vmem [shape: f32[1,128], index: 2, kind: input, shape index: {}]
  %s3 = inlined_call_operand.vmem [shape: bf16[128,16], index: 3, kind: input, shape index: {}]
  %s4 = inlined_call_operand.vmem [shape: f32[1,16], index: 4, kind: input, shape index: {}]
  %s5 = inlined_call_operand.hbm [shape: f32[8,16], index: 5, kind: output, shape index: {}]
  %s6 = sld [smem:[#allocation0]]
  $region30: #{tpu_custom_call.1} parent=0
    _
  %s8 = ssub.s32 1, %s6
  %s9 = scalar_select 0, %s8, %s6
  $region1: #{tpu_custom_call.1} parent=0
    #allocation2 [shape = 'u8[4096]{0}', space=vmem, size = 0x1000, scoped, tag = 'output window, operand 0, single buffered']
    #allocation3 [shape = 's32[1]{0}', space=sflag, size = 0x4, scoped, tag = 'scoped memory for tpu_custom_call.1']
    %10 = vsyncpa [#allocation3], 0
    // Predicated region
    $region2: #{tpu_custom_call.1} parent=1 // pred_check
      _
    $region3: #{tpu_custom_call.1} parent=1 // pred_check_branch
      %12 = sbr.rel (0) target = $region5
    $region4: #{tpu_custom_call.1} parent=1 // pred_region
      _
    $region5: #{tpu_custom_call.1} parent=1 // pred_fallthru
      _
    // Predicated region
    $region6: #{tpu_custom_call.1} parent=1 // pred_check
      _
    $region7: #{tpu_custom_call.1} parent=1 // pred_check_branch
      %14 = sbr.rel (0) target = $region9
    $region8: #{tpu_custom_call.1} parent=1 // pred_region
      _
    $region9: #{tpu_custom_call.1} parent=1 // pred_fallthru
      _
    // Predicated region
    $region10: #{tpu_custom_call.1} parent=1 // pred_check
      _
    $region11: #{tpu_custom_call.1} parent=1 // pred_check_branch
      %16 = sbr.rel (0) target = $region13
    $region12: #{tpu_custom_call.1} parent=1 // pred_region
      _
    $region13: #{tpu_custom_call.1} parent=1 // pred_fallthru
      _
    // Predicated region
    $region14: #{tpu_custom_call.1} parent=1 // pred_check
      _
    $region15: #{tpu_custom_call.1} parent=1 // pred_check_branch
      %18 = sbr.rel (0) target = $region17
    $region16: #{tpu_custom_call.1} parent=1 // pred_region
      _
    $region17: #{tpu_custom_call.1} parent=1 // pred_fallthru
      _
    // Predicated region
    $region18: #{tpu_custom_call.1} parent=1 // pred_check
      _
    $region19: #{tpu_custom_call.1} parent=1 // pred_check_branch
      %20 = sbr.rel (0) target = $region21
    $region20: #{tpu_custom_call.1} parent=1 // pred_region
      _
    $region21: #{tpu_custom_call.1} parent=1 // pred_fallthru
      _
    %v22 = vld [vmem:[%s0] sm:$0xff]
    %v23 = vpack.c.bf16 %v22, %v22
    %v24 = vld [vmem:[%s1] sm:$0xf]
    %v25 = vld [vmem:[%s1 + $0x4] sm:$0xf]
    %v26 = vld [vmem:[%s1 + $0x8] sm:$0xf]
    %v27 = vld [vmem:[%s1 + $0xc] sm:$0xf]
    %v28 = vld [vmem:[%s1 + $0x10] sm:$0xf]
    %v29 = vld [vmem:[%s1 + $0x14] sm:$0xf]
    %v30 = vld [vmem:[%s1 + $0x18] sm:$0xf]
    %v31 = vld [vmem:[%s1 + $0x1c] sm:$0xf]
    %v32 = vld [vmem:[%s2] sm:$0x1]
    %v34 = vlaneseq
    %v35 = vshrl.u32 %v34, 7
    %v36 = vsub.s32 0, %v35
    %v37 = vrot.slane %v32, %v36
    %v47 = vunpack.c.l.b16 %v24
    %v48 = vunpack.c.l.b16 %v25
    %v49 = vunpack.c.l.b16 %v26
    %v50 = vunpack.c.l.b16 %v27
    %v51 = vunpack.c.l.b16 %v28
    %v52 = vunpack.c.l.b16 %v29
    %v53 = vunpack.c.l.b16 %v30
    %v54 = vunpack.c.l.b16 %v31
    %v55 = vpack.c.b16 %v48, %v47
    %v56 = vpack.c.b16 %v50, %v49
    %v57 = vpack.c.b16 %v52, %v51
    %v58 = vpack.c.b16 %v54, %v53
    %vm63 = vcmask 523264
    %v65 = vsel %vm63, %v23, 0
    %67 = vmatprep.subr.bf16.mxu0 0
    %68 = vmatpush1.bf16.msra.mxu0 0
    %69 = vmatprep.subr.bf16.mxu0 0
    %70 = vmatpush1.bf16.msra.mxu0 0
    %71 = vmatprep.subr.bf16.mxu0 0
    %72 = vmatpush1.bf16.msra.mxu0 0
    %73 = vmatprep.subr.bf16.mxu0 0
    %74 = vmatpush1.bf16.msra.mxu0 0
    %75 = vmatprep.subr.bf16.mxu0 0
    %76 = vmatpush1.bf16.msra.mxu0 %v58
    %77 = vmatprep.subr.bf16.mxu0 0
    %78 = vmatpush1.bf16.msra.mxu0 %v57
    %79 = vmatprep.subr.bf16.mxu0 0
    %80 = vmatpush1.bf16.msra.mxu0 %v56
    %81 = vmatprep.subr.bf16.mxu0 0
    %82 = vmatpush1.bf16.msra.mxu0 %v55
    %83 = vmatprep.subr.bf16.mxu0 0
    %84 = vmatpush2.bf16.msra.mxu0 0
    %85 = vmatprep.subr.bf16.mxu0 0
    %86 = vmatpush2.bf16.msra.mxu0 0
    %87 = vmatprep.subr.bf16.mxu0 0
    %88 = vmatpush2.bf16.msra.mxu0 0
    %89 = vmatprep.subr.bf16.mxu0 0
    %90 = vmatpush2.bf16.msra.mxu0 0
    %91 = vmatprep.subr.bf16.mxu0 0
    %92 = vmatpush2.bf16.msra.mxu0 0
    %93 = vmatprep.subr.bf16.mxu0 0
    %94 = vmatpush2.bf16.msra.mxu0 0
    %95 = vmatprep.subr.bf16.mxu0 0
    %96 = vmatpush2.bf16.msra.mxu0 0
    %97 = vmatprep.subr.bf16.mxu0 0
    %98 = vmatpush2.bf16.msra.mxu0 0
    %99 = vmatprep.mubr.bf16.mxu0 0
    %100 = vmatmul.mubr.bf16.gmra.mxu0 %v65
    %v101 = vpop.f32.mrf.mxu0
    %v102 = vadd.f32 %v37, %v101
    %v103 = vpop.f32.mrf.mxu0
    %v104 = vpop.f32.mrf.mxu0
    %v105 = vpop.f32.mrf.mxu0
    %106 = vdwg.mxu0
    %v107 = vmax.f32 %v102, 0.0
    %v108 = vpack.c.bf16 %v107, %v107
    %v109 = vld [vmem:[%s3] sm:$0xf]
    %v110 = vld [vmem:[%s3 + $0x4] sm:$0xf]
    %v111 = vld [vmem:[%s3 + $0x8] sm:$0xf]
    %v112 = vld [vmem:[%s3 + $0xc] sm:$0xf]
    %v113 = vld [vmem:[%s3 + $0x10] sm:$0xf]
    %v114 = vld [vmem:[%s3 + $0x14] sm:$0xf]
    %v115 = vld [vmem:[%s3 + $0x18] sm:$0xf]
    %v116 = vld [vmem:[%s3 + $0x1c] sm:$0xf]
    %v117 = vld [vmem:[%s3 + $0x20] sm:$0xf]
    %v118 = vld [vmem:[%s3 + $0x24] sm:$0xf]
    %v119 = vld [vmem:[%s3 + $0x28] sm:$0xf]
    %v120 = vld [vmem:[%s3 + $0x2c] sm:$0xf]
    %v121 = vld [vmem:[%s3 + $0x30] sm:$0xf]
    %v122 = vld [vmem:[%s3 + $0x34] sm:$0xf]
    %v123 = vld [vmem:[%s3 + $0x38] sm:$0xf]
    %v124 = vld [vmem:[%s3 + $0x3c] sm:$0xf]
    %v125 = vld [vmem:[%s4] sm:$0x1]
    %v127 = vlaneseq
    %v128 = vshrl.u32 %v127, 7
    %v129 = vsub.s32 0, %v128
    %v130 = vrot.slane %v125, %v129
    %v148 = vunpack.c.l.b16 %v109
    %v149 = vunpack.c.l.b16 %v110
    %v150 = vunpack.c.l.b16 %v111
    %v151 = vunpack.c.l.b16 %v112
    %v152 = vunpack.c.l.b16 %v113
    %v153 = vunpack.c.l.b16 %v114
    %v154 = vunpack.c.l.b16 %v115
    %v155 = vunpack.c.l.b16 %v116
    %v156 = vunpack.c.l.b16 %v117
    %v157 = vunpack.c.l.b16 %v118
    %v158 = vunpack.c.l.b16 %v119
    %v159 = vunpack.c.l.b16 %v120
    %v160 = vunpack.c.l.b16 %v121
    %v161 = vunpack.c.l.b16 %v122
    %v162 = vunpack.c.l.b16 %v123
    %v163 = vunpack.c.l.b16 %v124
    %v164 = vpack.c.b16 %v149, %v148
    %v165 = vpack.c.b16 %v151, %v150
    %v166 = vpack.c.b16 %v153, %v152
    %v167 = vpack.c.b16 %v155, %v154
    %v168 = vpack.c.b16 %v157, %v156
    %v169 = vpack.c.b16 %v159, %v158
    %v170 = vpack.c.b16 %v161, %v160
    %v171 = vpack.c.b16 %v163, %v162
    %180 = vmatprep.subr.bf16.mxu0 0
    %181 = vmatpush1.bf16.msra.mxu0 %v171
    %182 = vmatprep.subr.bf16.mxu0 0
    %183 = vmatpush1.bf16.msra.mxu0 %v170
    %184 = vmatprep.subr.bf16.mxu0 0
    %185 = vmatpush1.bf16.msra.mxu0 %v169
    %186 = vmatprep.subr.bf16.mxu0 0
    %187 = vmatpush1.bf16.msra.mxu0 %v168
    %188 = vmatprep.subr.bf16.mxu0 0
    %189 = vmatpush1.bf16.msra.mxu0 %v167
    %190 = vmatprep.subr.bf16.mxu0 0
    %191 = vmatpush1.bf16.msra.mxu0 %v166
    %192 = vmatprep.subr.bf16.mxu0 0
    %193 = vmatpush1.bf16.msra.mxu0 %v165
    %194 = vmatprep.subr.bf16.mxu0 0
    %195 = vmatpush1.bf16.msra.mxu0 %v164
    %196 = vmatprep.subr.bf16.mxu0 0
    %197 = vmatpush2.bf16.msra.mxu0 0
    %198 = vmatprep.subr.bf16.mxu0 0
    %199 = vmatpush2.bf16.msra.mxu0 0
    %200 = vmatprep.subr.bf16.mxu0 0
    %201 = vmatpush2.bf16.msra.mxu0 0
    %202 = vmatprep.subr.bf16.mxu0 0
    %203 = vmatpush2.bf16.msra.mxu0 0
    %204 = vmatprep.subr.bf16.mxu0 0
    %205 = vmatpush2.bf16.msra.mxu0 0
    %206 = vmatprep.subr.bf16.mxu0 0
    %207 = vmatpush2.bf16.msra.mxu0 0
    %208 = vmatprep.subr.bf16.mxu0 0
    %209 = vmatpush2.bf16.msra.mxu0 0
    %210 = vmatprep.subr.bf16.mxu0 0
    %211 = vmatpush2.bf16.msra.mxu0 0
    %212 = vmatprep.mubr.bf16.mxu0 0
    %213 = vmatmul.mubr.bf16.gmra.mxu0 %v108
    %v214 = vpop.f32.mrf.mxu0
    %v215 = vadd.f32 %v130, %v214
    %v216 = vpop.f32.mrf.mxu0
    %v217 = vpop.f32.mrf.mxu0
    %v218 = vpop.f32.mrf.mxu0
    %219 = vdwg.mxu0
    %vm220 = vcmask 130048
    %221 = vst.msk [vmem:[#allocation2] sm:$0xff] %vm220, %v215
    // Predicated region
    $region22: #{tpu_custom_call.1} parent=1 // pred_check
      _
    $region23: #{tpu_custom_call.1} parent=1 // pred_check_branch
      %223 = sbr.rel (0) target = $region25
    $region24: #{tpu_custom_call.1} parent=1 // pred_region
      %s225 = ssub.s32 128, 128
      %226 = vsyncadd [#allocation3], %s225
      %s228 = sshll.u32 [#allocation2], 4
      %s229 = int_to_ptr.vmem [resolvable:$true] %s228
      %231 = dma.vmem_to_hbm [thread:$0]  %s229, 128, %s5, [#allocation3]
    $region25: #{tpu_custom_call.1} parent=1 // pred_fallthru
      _
    // Predicated region
    $region26: #{tpu_custom_call.1} parent=1 // pred_check
      _
    $region27: #{tpu_custom_call.1} parent=1 // pred_check_branch
      %233 = sbr.rel (0) target = $region29
    $region28: #{tpu_custom_call.1} parent=1 // pred_region
      %234 = dma.done [#allocation3], 128
    $region29: #{tpu_custom_call.1} parent=1 // pred_fallthru
      _
    %235 = vsyncpa [#allocation3], 1

// kernel: tpu_custom_call.1
$region0: #{tpu_custom_call.1}
  #allocation0 [shape = 'u32[]', space=smem, size = 0x4, offset = 0x4, fixed_abs, tag = 'smem constant byte address 0x4 - core index']
  #allocation1 [shape = 'u32[144,128]{1,0:T(1,128)}', space=vmem, size = 0x12000, scoped, tag = 'internal scratch']
  %s0 = inlined_call_operand.vmem [shape: f32[8,64], index: 0, kind: input, shape index: {}]
  %s1 = inlined_call_operand.vmem [shape: bf16[64,128], index: 1, kind: input, shape index: {}]
  %s2 = inlined_call_operand.vmem [shape: f32[1,128], index: 2, kind: input, shape index: {}]
  %s3 = inlined_call_operand.vmem [shape: bf16[128,16], index: 3, kind: input, shape index: {}]
  %s4 = inlined_call_operand.vmem [shape: f32[1,16], index: 4, kind: input, shape index: {}]
  %s5 = inlined_call_operand.hbm [shape: f32[8,16], index: 5, kind: output, shape index: {}]
  %s6 = sld [smem:[#allocation0]]
  $region30: #{tpu_custom_call.1} parent=0
    _
  %s8 = ssub.s32 1, %s6
  %s9 = scalar_select 0, %s8, %s6
  $region1: #{tpu_custom_call.1} parent=0
    #allocation2 [shape = 'u8[4096]{0}', space=vmem, size = 0x1000, scoped, tag = 'output window, operand 0, single buffered']
    #allocation3 [shape = 's32[1]{0}', space=sflag, size = 0x4, scoped, tag = 'scoped memory for tpu_custom_call.1']
    %10 = vsyncpa [#allocation3], 0
    // Predicated region
    $region2: #{tpu_custom_call.1} parent=1 // pred_check
      _
    $region3: #{tpu_custom_call.1} parent=1 // pred_check_branch
      %12 = sbr.rel (0) target = $region5
    $region4: #{tpu_custom_call.1} parent=1 // pred_region
      _
    $region5: #{tpu_custom_call.1} parent=1 // pred_fallthru
      _
    // Predicated region
    $region6: #{tpu_custom_call.1} parent=1 // pred_check
      _
    $region7: #{tpu_custom_call.1} parent=1 // pred_check_branch
      %14 = sbr.rel (0) target = $region9
    $region8: #{tpu_custom_call.1} parent=1 // pred_region
      _
    $region9: #{tpu_custom_call.1} parent=1 // pred_fallthru
      _
    // Predicated region
    $region10: #{tpu_custom_call.1} parent=1 // pred_check
      _
    $region11: #{tpu_custom_call.1} parent=1 // pred_check_branch
      %16 = sbr.rel (0) target = $region13
    $region12: #{tpu_custom_call.1} parent=1 // pred_region
      _
    $region13: #{tpu_custom_call.1} parent=1 // pred_fallthru
      _
    // Predicated region
    $region14: #{tpu_custom_call.1} parent=1 // pred_check
      _
    $region15: #{tpu_custom_call.1} parent=1 // pred_check_branch
      %18 = sbr.rel (0) target = $region17
    $region16: #{tpu_custom_call.1} parent=1 // pred_region
      _
    $region17: #{tpu_custom_call.1} parent=1 // pred_fallthru
      _
    // Predicated region
    $region18: #{tpu_custom_call.1} parent=1 // pred_check
      _
    $region19: #{tpu_custom_call.1} parent=1 // pred_check_branch
      %20 = sbr.rel (0) target = $region21
    $region20: #{tpu_custom_call.1} parent=1 // pred_region
      _
    $region21: #{tpu_custom_call.1} parent=1 // pred_fallthru
      _
    %v22 = vld [vmem:[%s0] sm:$0xff]
    %v23 = vpack.c.bf16 %v22, %v22
    %v24 = vld [vmem:[%s1] sm:$0xf]
    %v25 = vld [vmem:[%s1 + $0x4] sm:$0xf]
    %v26 = vld [vmem:[%s1 + $0x8] sm:$0xf]
    %v27 = vld [vmem:[%s1 + $0xc] sm:$0xf]
    %v28 = vld [vmem:[%s1 + $0x10] sm:$0xf]
    %v29 = vld [vmem:[%s1 + $0x14] sm:$0xf]
    %v30 = vld [vmem:[%s1 + $0x18] sm:$0xf]
    %v31 = vld [vmem:[%s1 + $0x1c] sm:$0xf]
    %v32 = vld [vmem:[%s2] sm:$0x1]
    %v34 = vlaneseq
    %v35 = vshrl.u32 %v34, 7
    %v36 = vsub.s32 0, %v35
    %v37 = vrot.slane %v32, %v36
    %v47 = vunpack.c.l.b16 %v24
    %v48 = vunpack.c.l.b16 %v25
    %v49 = vunpack.c.l.b16 %v26
    %v50 = vunpack.c.l.b16 %v27
    %v51 = vunpack.c.l.b16 %v28
    %v52 = vunpack.c.l.b16 %v29
    %v53 = vunpack.c.l.b16 %v30
    %v54 = vunpack.c.l.b16 %v31
    %v55 = vpack.c.b16 %v48, %v47
    %v56 = vpack.c.b16 %v50, %v49
    %v57 = vpack.c.b16 %v52, %v51
    %v58 = vpack.c.b16 %v54, %v53
    %vm63 = vcmask 523264
    %v65 = vsel %vm63, %v23, 0
    %67 = vmatprep.subr.bf16.mxu0 0
    %68 = vmatpush1.bf16.msra.mxu0 0
    %69 = vmatprep.subr.bf16.mxu0 0
    %70 = vmatpush1.bf16.msra.mxu0 0
    %71 = vmatprep.subr.bf16.mxu0 0
    %72 = vmatpush1.bf16.msra.mxu0 0
    %73 = vmatprep.subr.bf16.mxu0 0
    %74 = vmatpush1.bf16.msra.mxu0 0
    %75 = vmatprep.subr.bf16.mxu0 0
    %76 = vmatpush1.bf16.msra.mxu0 %v58
    %77 = vmatprep.subr.bf16.mxu0 0
    %78 = vmatpush1.bf16.msra.mxu0 %v57
    %79 = vmatprep.subr.bf16.mxu0 0
    %80 = vmatpush1.bf16.msra.mxu0 %v56
    %81 = vmatprep.subr.bf16.mxu0 0
    %82 = vmatpush1.bf16.msra.mxu0 %v55
    %83 = vmatprep.subr.bf16.mxu0 0
    %84 = vmatpush2.bf16.msra.mxu0 0
    %85 = vmatprep.subr.bf16.mxu0 0
    %86 = vmatpush2.bf16.msra.mxu0 0
    %87 = vmatprep.subr.bf16.mxu0 0
    %88 = vmatpush2.bf16.msra.mxu0 0
    %89 = vmatprep.subr.bf16.mxu0 0
    %90 = vmatpush2.bf16.msra.mxu0 0
    %91 = vmatprep.subr.bf16.mxu0 0
    %92 = vmatpush2.bf16.msra.mxu0 0
    %93 = vmatprep.subr.bf16.mxu0 0
    %94 = vmatpush2.bf16.msra.mxu0 0
    %95 = vmatprep.subr.bf16.mxu0 0
    %96 = vmatpush2.bf16.msra.mxu0 0
    %97 = vmatprep.subr.bf16.mxu0 0
    %98 = vmatpush2.bf16.msra.mxu0 0
    %99 = vmatprep.mubr.bf16.mxu0 0
    %100 = vmatmul.mubr.bf16.gmra.mxu0 %v65
    %v101 = vpop.f32.mrf.mxu0
    %v102 = vadd.f32 %v37, %v101
    %v103 = vpop.f32.mrf.mxu0
    %v104 = vpop.f32.mrf.mxu0
    %v105 = vpop.f32.mrf.mxu0
    %106 = vdwg.mxu0
    %v107 = vmax.f32 %v102, 0.0
    %v108 = vpack.c.bf16 %v107, %v107
    %v109 = vld [vmem:[%s3] sm:$0xf]
    %v110 = vld [vmem:[%s3 + $0x4] sm:$0xf]
    %v111 = vld [vmem:[%s3 + $0x8] sm:$0xf]
    %v112 = vld [vmem:[%s3 + $0xc] sm:$0xf]
    %v113 = vld [vmem:[%s3 + $0x10] sm:$0xf]
    %v114 = vld [vmem:[%s3 + $0x14] sm:$0xf]
    %v115 = vld [vmem:[%s3 + $0x18] sm:$0xf]
    %v116 = vld [vmem:[%s3 + $0x1c] sm:$0xf]
    %v117 = vld [vmem:[%s3 + $0x20] sm:$0xf]
    %v118 = vld [vmem:[%s3 + $0x24] sm:$0xf]
    %v119 = vld [vmem:[%s3 + $0x28] sm:$0xf]
    %v120 = vld [vmem:[%s3 + $0x2c] sm:$0xf]
    %v121 = vld [vmem:[%s3 + $0x30] sm:$0xf]
    %v122 = vld [vmem:[%s3 + $0x34] sm:$0xf]
    %v123 = vld [vmem:[%s3 + $0x38] sm:$0xf]
    %v124 = vld [vmem:[%s3 + $0x3c] sm:$0xf]
    %v125 = vld [vmem:[%s4] sm:$0x1]
    %v127 = vlaneseq
    %v128 = vshrl.u32 %v127, 7
    %v129 = vsub.s32 0, %v128
    %v130 = vrot.slane %v125, %v129
    %v148 = vunpack.c.l.b16 %v109
    %v149 = vunpack.c.l.b16 %v110
    %v150 = vunpack.c.l.b16 %v111
    %v151 = vunpack.c.l.b16 %v112
    %v152 = vunpack.c.l.b16 %v113
    %v153 = vunpack.c.l.b16 %v114
    %v154 = vunpack.c.l.b16 %v115
    %v155 = vunpack.c.l.b16 %v116
    %v156 = vunpack.c.l.b16 %v117
    %v157 = vunpack.c.l.b16 %v118
    %v158 = vunpack.c.l.b16 %v119
    %v159 = vunpack.c.l.b16 %v120
    %v160 = vunpack.c.l.b16 %v121
    %v161 = vunpack.c.l.b16 %v122
    %v162 = vunpack.c.l.b16 %v123
    %v163 = vunpack.c.l.b16 %v124
    %v164 = vpack.c.b16 %v149, %v148
    %v165 = vpack.c.b16 %v151, %v150
    %v166 = vpack.c.b16 %v153, %v152
    %v167 = vpack.c.b16 %v155, %v154
    %v168 = vpack.c.b16 %v157, %v156
    %v169 = vpack.c.b16 %v159, %v158
    %v170 = vpack.c.b16 %v161, %v160
    %v171 = vpack.c.b16 %v163, %v162
    %180 = vmatprep.subr.bf16.mxu0 0
    %181 = vmatpush1.bf16.msra.mxu0 %v171
    %182 = vmatprep.subr.bf16.mxu0 0
    %183 = vmatpush1.bf16.msra.mxu0 %v170
    %184 = vmatprep.subr.bf16.mxu0 0
    %185 = vmatpush1.bf16.msra.mxu0 %v169
    %186 = vmatprep.subr.bf16.mxu0 0
    %187 = vmatpush1.bf16.msra.mxu0 %v168
    %188 = vmatprep.subr.bf16.mxu0 0
    %189 = vmatpush1.bf16.msra.mxu0 %v167
    %190 = vmatprep.subr.bf16.mxu0 0
    %191 = vmatpush1.bf16.msra.mxu0 %v166
    %192 = vmatprep.subr.bf16.mxu0 0
    %193 = vmatpush1.bf16.msra.mxu0 %v165
    %194 = vmatprep.subr.bf16.mxu0 0
    %195 = vmatpush1.bf16.msra.mxu0 %v164
    %196 = vmatprep.subr.bf16.mxu0 0
    %197 = vmatpush2.bf16.msra.mxu0 0
    %198 = vmatprep.subr.bf16.mxu0 0
    %199 = vmatpush2.bf16.msra.mxu0 0
    %200 = vmatprep.subr.bf16.mxu0 0
    %201 = vmatpush2.bf16.msra.mxu0 0
    %202 = vmatprep.subr.bf16.mxu0 0
    %203 = vmatpush2.bf16.msra.mxu0 0
    %204 = vmatprep.subr.bf16.mxu0 0
    %205 = vmatpush2.bf16.msra.mxu0 0
    %206 = vmatprep.subr.bf16.mxu0 0
    %207 = vmatpush2.bf16.msra.mxu0 0
    %208 = vmatprep.subr.bf16.mxu0 0
    %209 = vmatpush2.bf16.msra.mxu0 0
    %210 = vmatprep.subr.bf16.mxu0 0
    %211 = vmatpush2.bf16.msra.mxu0 0
    %212 = vmatprep.mubr.bf16.mxu0 0
    %213 = vmatmul.mubr.bf16.gmra.mxu0 %v108
    %v214 = vpop.f32.mrf.mxu0
    %v215 = vadd.f32 %v130, %v214
    %v216 = vpop.f32.mrf.mxu0
    %v217 = vpop.f32.mrf.mxu0
    %v218 = vpop.f32.mrf.mxu0
    %219 = vdwg.mxu0
    %vm220 = vcmask 130048
    %221 = vst.msk [vmem:[#allocation2] sm:$0xff] %vm220, %v215
    // Predicated region
    $region22: #{tpu_custom_call.1} parent=1 // pred_check
      _
    $region23: #{tpu_custom_call.1} parent=1 // pred_check_branch
      %223 = sbr.rel (0) target = $region25
    $region24: #{tpu_custom_call.1} parent=1 // pred_region
      %s225 = ssub.s32 128, 128
      %226 = vsyncadd [#allocation3], %s225
      %s228 = sshll.u32 [#allocation2], 4
      %s229 = int_to_ptr.vmem [resolvable:$true] %s228
      %231 = dma.vmem_to_hbm [thread:$0]  %s229, 128, %s5, [#allocation3]
    $region25: #{tpu_custom_call.1} parent=1 // pred_fallthru
      _
    // Predicated region
    $region26: #{tpu_custom_call.1} parent=1 // pred_check
      _
    $region27: #{tpu_custom_call.1} parent=1 // pred_check_branch
      %233 = sbr.rel (0) target = $region29
    $region28: #{tpu_custom_call.1} parent=1 // pred_region
      %234 = dma.done [#allocation3], 128
    $region29: #{tpu_custom_call.1} parent=1 // pred_fallthru
      _
    %235 = vsyncpa [#allocation3], 1

</llo_original>
